<compile_context>
chip_gen: v6e
topology: v6e:2x2x1
jax: 0.10.0
libtpu: 0.0.40
codegen_flags: <defaults>
</compile_context>

<pallas_src>
import functools

import jax
import jax.numpy as jnp
from jax.experimental import pallas as pl
from jax.experimental.pallas import tpu as pltpu

_LANES = 128           # vreg lane width -> full-width, unmasked vector stores
_MAX_TILE_ROWS = 2048  # 2048 x 128 x 4B = 1 MiB per f32 buffer


def _general_relu_kernel(x_ref, o_ref, *, leak, sub, maxv):
    # Compute in f32 for precision; cast back at the store (no-op for f32 in/out).
    x = x_ref[...].astype(jnp.float32)
    if leak is not None:
        y = jnp.where(x >= 0, x, x * jnp.float32(leak))
    else:
        y = jnp.maximum(x, jnp.float32(0.0))
    if sub is not None:
        y = y - jnp.float32(sub)
    if maxv is not None:
        y = jnp.minimum(y, jnp.float32(maxv))
    o_ref[...] = y.astype(o_ref.dtype)


def _round_up(a, b):
    return ((a + b - 1) // b) * b


def general_relu(x, leak=None, sub=None, maxv=None):
    """Pallas TPU implementation of GeneralRelu.forward.

    Works for any shape/dtype: the tensor is viewed as a lane-dense
    (rows, 128) slab, streamed through a tiled 1D grid, and reshaped back.
    """
    orig_shape = x.shape
    orig_dtype = x.dtype
    n = x.size

    # Lane-dense layout. Only pad when the element count is not a multiple of
    # 128 (rare); raggedness in the row dimension is handled by the grid.
    rows = max(1, pl.cdiv(n, _LANES))
    padded_n = rows * _LANES

    x_flat = x.reshape(-1)
    if padded_n != n:
        x_flat = jnp.pad(x_flat, (0, padded_n - n))
    x2d = x_flat.reshape(rows, _LANES)

    if rows <= _MAX_TILE_ROWS:
        # Single block covering the whole array (block == full dims is always
        # a legal block shape), no grid-step overhead at all.
        tile_rows = rows
    else:
        tile_rows = _MAX_TILE_ROWS  # multiple of 8 -> legal (8,128) tiling
    grid = (pl.cdiv(rows, tile_rows),)

    kernel = functools.partial(_general_relu_kernel, leak=leak, sub=sub, maxv=maxv)

    out2d = pl.pallas_call(
        kernel,
        out_shape=jax.ShapeDtypeStruct((rows, _LANES), orig_dtype),
        grid=grid,
        in_specs=[pl.BlockSpec((tile_rows, _LANES), lambda i: (i, 0))],
        out_specs=pl.BlockSpec((tile_rows, _LANES), lambda i: (i, 0)),
        compiler_params=pltpu.CompilerParams(
            dimension_semantics=("parallel",),  # shards tiles across both TCs on v7x
        ),
    )(x2d)

    if padded_n != n:
        return out2d.reshape(-1)[:n].reshape(orig_shape)
    return out2d.reshape(orig_shape)


if __name__ == "__main__":
    key = jax.random.PRNGKey(0)
    # NCHW input, small shape consistent with a conv activation.
    x = jax.random.normal(key, (2, 4, 16, 16), dtype=jnp.float32)

    # GeneralRelu(leak=0.1, sub=0.4, maxv=6.0) -- deterministic module params.
    leak, sub, maxv = 0.1, 0.4, 6.0

    out = jax.block_until_ready(general_relu(x, leak=leak, sub=sub, maxv=maxv))

    # Reference check in plain JAX.
    ref = jnp.minimum(jnp.where(x >= 0, x, leak * x) - sub, maxv)
    assert out.shape == x.shape and out.dtype == x.dtype
    assert jnp.allclose(out, ref, atol=1e-6), "mismatch vs reference"

    # Relu-only path (leak/sub/maxv = None).
    out2 = jax.block_until_ready(general_relu(x))
    assert jnp.allclose(out2, jnp.maximum(x, 0.0), atol=1e-6), "relu path mismatch"

    # Non-multiple-of-128 element count exercises the (rare) padded path.
    x_odd = jax.random.normal(key, (3, 7, 5), dtype=jnp.float32)
    out3 = jax.block_until_ready(general_relu(x_odd, leak=leak, sub=sub, maxv=maxv))
    ref3 = jnp.minimum(jnp.where(x_odd >= 0, x_odd, leak * x_odd) - sub, maxv)
    assert jnp.allclose(out3, ref3, atol=1e-6), "padded path mismatch"

    # bf16 input exercises the f32-compute / cast-back path.
    xb = x.astype(jnp.bfloat16)
    out4 = jax.block_until_ready(general_relu(xb, leak=leak, sub=sub, maxv=maxv))
    ref4 = jnp.minimum(
        jnp.where(xb.astype(jnp.float32) >= 0,
                  xb.astype(jnp.float32),
                  leak * xb.astype(jnp.float32)) - sub, maxv).astype(jnp.bfloat16)
    assert out4.dtype == jnp.bfloat16
    assert jnp.allclose(out4.astype(jnp.float32), ref4.astype(jnp.float32), atol=1e-2)

    print("KERNEL_OK")
</pallas_src>

<mosaic_0001>
module attributes {stable_mosaic.version = 11 : i64} {
  func.func @_general_relu_kernel(%arg0: i32, %arg1: memref<16x128xf32, #tpu.memory_space<vmem>>, %arg2: memref<16x128xf32, #tpu.memory_space<vmem>>) attributes {dimension_semantics = [#tpu.dimension_semantics<parallel>], iteration_bounds = array<i64: 1>, scalar_prefetch = 0 : i64, scratch_operands = 0 : i64, tpu.core_type = #tpu.core_type<tc>, window_params = [{transform_indices = @transform_0, window_bounds = array<i64: 16, 128>}, {transform_indices = @transform_1, window_bounds = array<i64: 16, 128>}]} {
    %c0 = arith.constant 0 : index
    %c0_0 = arith.constant 0 : index
    %0 = vector.load %arg1[%c0, %c0_0] : memref<16x128xf32, #tpu.memory_space<vmem>>, vector<16x128xf32>
    %cst = arith.constant 0.000000e+00 : f32
    %1 = vector.broadcast %cst : f32 to vector<16x128xf32>
    %2 = arith.cmpf oge, %0, %1 : vector<16x128xf32>
    %cst_1 = arith.constant 1.000000e-01 : f32
    %3 = vector.broadcast %cst_1 : f32 to vector<16x128xf32>
    %4 = arith.mulf %0, %3 : vector<16x128xf32>
    %5 = arith.select %2, %0, %4 : vector<16x128xi1>, vector<16x128xf32>
    %cst_2 = arith.constant 4.000000e-01 : f32
    %6 = vector.broadcast %cst_2 : f32 to vector<16x128xf32>
    %7 = arith.subf %5, %6 : vector<16x128xf32>
    %cst_3 = arith.constant 6.000000e+00 : f32
    %8 = vector.broadcast %cst_3 : f32 to vector<16x128xf32>
    %9 = arith.minimumf %7, %8 : vector<16x128xf32>
    %c0_4 = arith.constant 0 : index
    %c0_5 = arith.constant 0 : index
    %10 = vector.load %arg2[%c0_4, %c0_5] : memref<16x128xf32, #tpu.memory_space<vmem>>, vector<16x128xf32>
    tpu.vector_store %arg2[%c0_4, %c0_5], %9 {strides = array<i32>} : memref<16x128xf32, #tpu.memory_space<vmem>>, vector<16x128xf32>,
    return
  }
  func.func @transform_0(%arg0: i32) -> (i32, i32) {
    %c0_i32 = arith.constant 0 : i32
    %c0_i32_0 = arith.constant 0 : i32
    return %arg0, %c0_i32 : i32, i32
  }
  func.func @transform_1(%arg0: i32) -> (i32, i32) {
    %c0_i32 = arith.constant 0 : i32
    %c0_i32_0 = arith.constant 0 : i32
    return %arg0, %c0_i32 : i32, i32
  }
}

</mosaic_0001>

<llo_original>
// kernel: tpu_custom_call.1
$region0: #{tpu_custom_call.1}
  #allocation0 [shape = 'u32[]', space=smem, size = 0x4, offset = 0x4, fixed_abs, tag = 'smem constant byte address 0x4 - core index']
  #allocation1 [shape = 'u32[144,128]{1,0:T(1,128)}', space=vmem, size = 0x12000, scoped, tag = 'internal scratch']
  %s0 = inlined_call_operand.hbm [shape: f32[16,128], index: 0, kind: input, shape index: {}]
  %s1 = inlined_call_operand.hbm [shape: f32[16,128], index: 1, kind: output, shape index: {}]
  %s2 = sld [smem:[#allocation0]]
  $region18: #{tpu_custom_call.1} parent=0
    _
  %s4 = ssub.s32 1, %s2
  %s5 = scalar_select 0, %s4, %s2
  $region1: #{tpu_custom_call.1} parent=0
    #allocation2 [shape = 'u8[8192]{0}', space=vmem, size = 0x2000, scoped, tag = 'input window, operand 0, single buffered']
    #allocation3 [shape = 's32[1]{0}', space=sflag, size = 0x4, scoped, tag = 'scoped memory for tpu_custom_call.1']
    #allocation4 [shape = 's32[1]{0}', space=sflag, size = 0x4, scoped, tag = 'scoped memory for tpu_custom_call.1']
    #allocation5 [shape = 'u8[8192]{0}', space=vmem, size = 0x2000, scoped, tag = 'output window, operand 0, single buffered']
    %6 = vsyncpa [#allocation3], 0
    %7 = vsyncpa [#allocation4], 0
    // Predicated region
    $region2: #{tpu_custom_call.1} parent=1 // pred_check
      _
    $region3: #{tpu_custom_call.1} parent=1 // pred_check_branch
      %9 = sbr.rel (0) target = $region5
    $region4: #{tpu_custom_call.1} parent=1 // pred_region
      %s11 = ssub.s32 256, 256
      %12 = vsyncadd [#allocation3], %s11
      %s13 = sshll.u32 [#allocation2], 4
      %s14 = int_to_ptr.vmem [resolvable:$true] %s13
      %19 = dma.hbm_to_vmem [thread:$0]  %s0, 256, %s14, [#allocation3], 128, 128, 8
    $region5: #{tpu_custom_call.1} parent=1 // pred_fallthru
      _
    // Predicated region
    $region6: #{tpu_custom_call.1} parent=1 // pred_check
      _
    $region7: #{tpu_custom_call.1} parent=1 // pred_check_branch
      %21 = sbr.rel (0) target = $region9
    $region8: #{tpu_custom_call.1} parent=1 // pred_region
      %22 = dma.done [#allocation3], 256
    $region9: #{tpu_custom_call.1} parent=1 // pred_fallthru
      _
    %v23 = vld [vmem:[#allocation2] sm:$0xff]
    %v24 = vld [vmem:[#allocation2 + $0x8] sm:$0xff]
    %vm25 = vcmp.ge.f32.partialorder %v23, 0.0
    %vm26 = vcmp.ge.f32.partialorder %v24, 0.0
    %v27 = vmul.f32 %v23, 0.1
    %v28 = vmul.f32 %v24, 0.1
    %v29 = vsel %vm25, %v23, %v27
    %v30 = vsel %vm26, %v24, %v28
    %v31 = vsub.f32 %v29, 0.4
    %v32 = vsub.f32 %v30, 0.4
    %v33 = vmin.f32 %v31, 6.0
    %v34 = vmin.f32 %v32, 6.0
    %35 = vst [vmem:[#allocation5] sm:$0xff] %v33
    %36 = vst [vmem:[#allocation5 + $0x8] sm:$0xff] %v34
    // Predicated region
    $region10: #{tpu_custom_call.1} parent=1 // pred_check
      _
    $region11: #{tpu_custom_call.1} parent=1 // pred_check_branch
      %38 = sbr.rel (0) target = $region13
    $region12: #{tpu_custom_call.1} parent=1 // pred_region
      %s40 = ssub.s32 256, 256
      %41 = vsyncadd [#allocation4], %s40
      %s42 = sshll.u32 [#allocation5], 4
      %s43 = int_to_ptr.vmem [resolvable:$true] %s42
      %48 = dma.vmem_to_hbm [thread:$0]  %s43, 256, %s1, [#allocation4], 128, 128, 8
    $region13: #{tpu_custom_call.1} parent=1 // pred_fallthru
      _
    // Predicated region
    $region14: #{tpu_custom_call.1} parent=1 // pred_check
      _
    $region15: #{tpu_custom_call.1} parent=1 // pred_check_branch
      %50 = sbr.rel (0) target = $region17
    $region16: #{tpu_custom_call.1} parent=1 // pred_region
      %51 = dma.done [#allocation4], 256
    $region17: #{tpu_custom_call.1} parent=1 // pred_fallthru
      _
    %52 = vsyncpa [#allocation3], 1
    %53 = vsyncpa [#allocation4], 1

</llo_original>
